<compile_context>
chip_gen: v7x
topology: tpu7x:2x2x1
jax: 0.10.0
libtpu: 0.0.40
codegen_flags: <defaults>
</compile_context>

<pallas_src>
import functools

import jax
import jax.numpy as jnp
from jax.experimental import pallas as pl
from jax.experimental.pallas import tpu as pltpu

_EPS = 1e-5


def residual_block_kernel(x_ref, w1_ref, w2_ref, o_ref, *, H, W, compute_dtype):
    # x_ref:  (C, H*W)  lane-dense input (also the residual)
    # w*_ref: (C, 9*C)  fused im2col weights, column = (ky*3+kx)*C + c_in
    # o_ref:  (C, H*W)
    C = x_ref.shape[0]
    HW = H * W
    inv_hw = jnp.float32(1.0 / HW)

    # Lane-position masks for the reflection fix-ups (built once, reused by
    # both convs).  lane = h*W + w.
    lane = jax.lax.broadcasted_iota(jnp.int32, (C, HW), 1)
    col = lane % W
    first_col = col == 0
    last_col = col == W - 1
    first_row = lane < W
    last_row = lane >= HW - W

    def shifted_windows(img):
        """Nine reflection-padded 3x3 windows of img (C, H*W), lane-dense.

        Returned in k = ky*3 + kx order to match the fused weight columns.
        Lane rolls wrap across row boundaries, but every wrapped lane is
        exactly a reflected boundary lane and is overwritten by the jnp.where
        fix-up (which pulls from the opposite roll of the SAME image), so no
        cross-row contamination survives.
        """
        right = pltpu.roll(img, 1, axis=1)        # value at p: img[p-1]
        left = pltpu.roll(img, HW - 1, axis=1)    # value at p: img[p+1]
        cols = (
            jnp.where(first_col, left, right),    # kx=0: x[., h, reflect(w-1)]
            img,                                  # kx=1: x[., h, w]
            jnp.where(last_col, right, left),     # kx=2: x[., h, reflect(w+1)]
        )
        rows_of = []
        for c in cols:
            up = pltpu.roll(c, W, axis=1)         # value at p: c[p-W]
            down = pltpu.roll(c, HW - W, axis=1)  # value at p: c[p+W]
            rows_of.append((
                jnp.where(first_row, down, up),   # ky=0: reflect(h-1)
                c,                                # ky=1: h
                jnp.where(last_row, up, down),    # ky=2: reflect(h+1)
            ))
        return [rows_of[kx][ky] for ky in range(3) for kx in range(3)]

    def conv3x3(img, w_ref):
        # One fused im2col matmul on the MXU: (C, 9C) x (9C, HW), f32 acc.
        patches = jnp.concatenate(
            shifted_windows(img.astype(compute_dtype)), axis=0)   # (9C, HW)
        return jnp.dot(w_ref[...], patches,
                       preferred_element_type=jnp.float32)        # (C, HW) f32

    def instance_norm(y):
        mean = jnp.sum(y, axis=1, keepdims=True) * inv_hw
        centered = y - mean
        var = jnp.sum(centered * centered, axis=1, keepdims=True) * inv_hw
        return centered * jax.lax.rsqrt(var + _EPS)

    x = x_ref[...]                                                # (C, HW) f32
    h = jnp.maximum(instance_norm(conv3x3(x, w1_ref)), 0.0)       # conv1+IN+ReLU
    y = instance_norm(conv3x3(h, w2_ref))                         # conv2+IN
    o_ref[...] = (x + y).astype(o_ref.dtype)                      # residual add


def residual_block(x, w1, b1, w2, b2, *, compute_dtype=jnp.bfloat16):
    """x: (N, C, H, W) f32; w*: (C, C, 3, 3); b*: (C,).

    compute_dtype sets the MXU operand dtype (accumulation is always f32).
    bf16 (default) is the fast path on v6e/v7x; pass jnp.float32 for
    reference-tolerance results.
    """
    N, C, H, W = x.shape
    if H < 2 or W < 2:
        raise ValueError("ReflectionPad2d(1) requires H >= 2 and W >= 2")
    HW = H * W  # best DMA/vst efficiency when H*W is a multiple of 128

    # Conv biases are mathematically cancelled by InstanceNorm2d(affine=False):
    # a per-channel constant shifts that channel's mean by the same amount and
    # is removed by the mean subtraction.  Only valid for affine=False.
    del b1, b2

    x_flat = x.reshape(N, C, HW)

    # Fused im2col weights: (C_out, 9*C_in), column = (ky*3+kx)*C + c_in.
    w1_f = jnp.transpose(w1, (0, 2, 3, 1)).reshape(C, 9 * C).astype(compute_dtype)
    w2_f = jnp.transpose(w2, (0, 2, 3, 1)).reshape(C, 9 * C).astype(compute_dtype)

    kernel = functools.partial(residual_block_kernel, H=H, W=W,
                               compute_dtype=compute_dtype)

    cd_bytes = jnp.dtype(compute_dtype).itemsize
    x_bytes = jnp.dtype(x.dtype).itemsize
    cost = pl.CostEstimate(
        flops=2 * 2 * 9 * C * C * HW * N,          # two 3x3 convs
        transcendentals=2 * N * C,                 # rsqrt per (sample, channel)
        bytes_accessed=2 * N * C * HW * x_bytes + 2 * 9 * C * C * cd_bytes,
    )

    out_flat = pl.pallas_call(
        kernel,
        out_shape=jax.ShapeDtypeStruct((N, C, HW), x.dtype),
        grid=(N,),
        in_specs=[
            pl.BlockSpec((None, C, HW), lambda n: (n, 0, 0)),
            pl.BlockSpec((C, 9 * C), lambda n: (0, 0)),   # resident weights
            pl.BlockSpec((C, 9 * C), lambda n: (0, 0)),
        ],
        out_specs=pl.BlockSpec((None, C, HW), lambda n: (n, 0, 0)),
        compiler_params=pltpu.CompilerParams(
            dimension_semantics=("parallel",),
            vmem_limit_bytes=32 * 1024 * 1024,
        ),
        cost_estimate=cost,
    )(x_flat, w1_f, w2_f)

    return out_flat.reshape(N, C, H, W)


def residual_block_reference(x, w1, b1, w2, b2):
    """Pure-JAX reference of the PyTorch module's forward (biases included)."""
    def pad_reflect(a):
        a = jnp.concatenate([a[:, :, 1:2, :], a, a[:, :, -2:-1, :]], axis=2)
        a = jnp.concatenate([a[:, :, :, 1:2], a, a[:, :, :, -2:-1]], axis=3)
        return a

    def conv(a, w, b):
        out = jax.lax.conv_general_dilated(
            a, w, window_strides=(1, 1), padding="VALID",
            dimension_numbers=("NCHW", "OIHW", "NCHW"))
        return out + b[None, :, None, None]

    def inorm(a):
        m = jnp.mean(a, axis=(2, 3), keepdims=True)
        v = jnp.var(a, axis=(2, 3), keepdims=True)
        return (a - m) / jnp.sqrt(v + 1e-5)

    h = inorm(conv(pad_reflect(x), w1, b1))
    h = jnp.maximum(h, 0.0)
    h = inorm(conv(pad_reflect(h), w2, b2))
    return x + h


if __name__ == "__main__":
    N, C, H, W = 2, 4, 16, 16
    key = jax.random.PRNGKey(0)
    kx, kw1, kb1, kw2, kb2 = jax.random.split(key, 5)

    x = jax.random.normal(kx, (N, C, H, W), dtype=jnp.float32)
    # Deterministic "Conv2d(C, C, 3)" parameters (uniform ~ +-1/sqrt(fan_in)).
    bound = 1.0 / jnp.sqrt(jnp.float32(C * 3 * 3))
    w1 = jax.random.uniform(kw1, (C, C, 3, 3), jnp.float32, -bound, bound)
    b1 = jax.random.uniform(kb1, (C,), jnp.float32, -bound, bound)
    w2 = jax.random.uniform(kw2, (C, C, 3, 3), jnp.float32, -bound, bound)
    b2 = jax.random.uniform(kb2, (C,), jnp.float32, -bound, bound)

    ref = jax.block_until_ready(residual_block_reference(x, w1, b1, w2, b2))

    # f32 MXU-operand path: tight check against the reference.
    out = jax.block_until_ready(
        residual_block(x, w1, b1, w2, b2, compute_dtype=jnp.float32))
    assert out.shape == ref.shape and out.dtype == ref.dtype
    assert jnp.allclose(out, ref, atol=1e-4, rtol=1e-4), (
        float(jnp.max(jnp.abs(out - ref))))

    # Default bf16 MXU-operand path (f32 accumulation): loose sanity check.
    out_bf16 = jax.block_until_ready(residual_block(x, w1, b1, w2, b2))
    assert jnp.allclose(out_bf16, ref, atol=1e-1, rtol=1e-1), (
        float(jnp.max(jnp.abs(out_bf16 - ref))))

    print("KERNEL_OK")
</pallas_src>

<mosaic_0001>
module attributes {stable_mosaic.version = 11 : i64} {
  func.func @residual_block_kernel(%arg0: i32, %arg1: memref<1x4x256xf32, #tpu.memory_space<vmem>>, %arg2: memref<4x36xf32, #tpu.memory_space<vmem>>, %arg3: memref<4x36xf32, #tpu.memory_space<vmem>>, %arg4: memref<1x4x256xf32, #tpu.memory_space<vmem>>) attributes {dimension_semantics = [#tpu.dimension_semantics<parallel>], iteration_bounds = array<i64: 2>, scalar_prefetch = 0 : i64, scratch_operands = 0 : i64, tpu.core_type = #tpu.core_type<tc>, window_params = [{transform_indices = @transform_0, window_bounds = array<i64: 1, 4, 256>}, {pipeline_mode = #tpu.pipeline_mode<synchronous>, transform_indices = @transform_1, window_bounds = array<i64: 4, 36>}, {pipeline_mode = #tpu.pipeline_mode<synchronous>, transform_indices = @transform_2, window_bounds = array<i64: 4, 36>}, {transform_indices = @transform_3, window_bounds = array<i64: 1, 4, 256>}]} {
    %0 = tpu.iota {dimensions = array<i32: 1>} : vector<4x256xi32>
    %c16_i32 = arith.constant 16 : i32
    %c0_i32 = arith.constant 0 : i32
    %1 = arith.cmpi eq, %c16_i32, %c0_i32 : i32
    %c1_i32 = arith.constant 1 : i32
    %2 = arith.select %1, %c1_i32, %c16_i32 : i32
    %3 = vector.broadcast %2 : i32 to vector<4x256xi32>
    %4 = arith.remsi %0, %3 : vector<4x256xi32>
    %c0_i32_0 = arith.constant 0 : i32
    %5 = vector.broadcast %c0_i32_0 : i32 to vector<4x256xi32>
    %6 = arith.cmpi ne, %4, %5 : vector<4x256xi32>
    %c0_i32_1 = arith.constant 0 : i32
    %7 = vector.broadcast %c0_i32_1 : i32 to vector<4x256xi32>
    %8 = arith.cmpi slt, %4, %7 : vector<4x256xi32>
    %c0_i32_2 = arith.constant 0 : i32
    %9 = arith.cmpi slt, %2, %c0_i32_2 : i32
    %10 = vector.broadcast %9 : i1 to vector<4x256xi1>
    %11 = vector.broadcast %10 : vector<4x256xi1> to vector<4x256xi1>
    %12 = arith.xori %8, %11 : vector<4x256xi1>
    %13 = arith.andi %12, %6 : vector<4x256xi1>
    %14 = vector.broadcast %2 : i32 to vector<4x256xi32>
    %15 = arith.addi %4, %14 : vector<4x256xi32>
    %16 = arith.select %13, %15, %4 : vector<4x256xi1>, vector<4x256xi32>
    %c0_i32_3 = arith.constant 0 : i32
    %17 = vector.broadcast %c0_i32_3 : i32 to vector<4x256xi32>
    %18 = arith.cmpi eq, %16, %17 : vector<4x256xi32>
    %c15_i32 = arith.constant 15 : i32
    %19 = vector.broadcast %c15_i32 : i32 to vector<4x256xi32>
    %20 = arith.cmpi eq, %16, %19 : vector<4x256xi32>
    %c16_i32_4 = arith.constant 16 : i32
    %21 = vector.broadcast %c16_i32_4 : i32 to vector<4x256xi32>
    %22 = arith.cmpi slt, %0, %21 : vector<4x256xi32>
    %c240_i32 = arith.constant 240 : i32
    %23 = vector.broadcast %c240_i32 : i32 to vector<4x256xi32>
    %24 = arith.cmpi sge, %0, %23 : vector<4x256xi32>
    %c0 = arith.constant 0 : index
    %c0_5 = arith.constant 0 : index
    %c0_6 = arith.constant 0 : index
    %25 = vector.load %arg1[%c0, %c0_5, %c0_6] : memref<1x4x256xf32, #tpu.memory_space<vmem>>, vector<1x4x256xf32>
    %26 = vector.shape_cast %25 : vector<1x4x256xf32> to vector<4x256xf32>
    %c1_i32_7 = arith.constant 1 : i32
    %27 = tpu.dynamic_rotate %26 by %c1_i32_7 dim 1 : vector<4x256xf32>, i32 -> vector<4x256xf32>
    %c255_i32 = arith.constant 255 : i32
    %28 = tpu.dynamic_rotate %26 by %c255_i32 dim 1 : vector<4x256xf32>, i32 -> vector<4x256xf32>
    %29 = arith.select %18, %28, %27 : vector<4x256xi1>, vector<4x256xf32>
    %30 = arith.select %20, %27, %28 : vector<4x256xi1>, vector<4x256xf32>
    %c16_i32_8 = arith.constant 16 : i32
    %31 = tpu.dynamic_rotate %29 by %c16_i32_8 dim 1 : vector<4x256xf32>, i32 -> vector<4x256xf32>
    %c240_i32_9 = arith.constant 240 : i32
    %32 = tpu.dynamic_rotate %29 by %c240_i32_9 dim 1 : vector<4x256xf32>, i32 -> vector<4x256xf32>
    %33 = arith.select %22, %32, %31 : vector<4x256xi1>, vector<4x256xf32>
    %34 = arith.select %24, %31, %32 : vector<4x256xi1>, vector<4x256xf32>
    %c16_i32_10 = arith.constant 16 : i32
    %35 = tpu.dynamic_rotate %26 by %c16_i32_10 dim 1 : vector<4x256xf32>, i32 -> vector<4x256xf32>
    %c240_i32_11 = arith.constant 240 : i32
    %36 = tpu.dynamic_rotate %26 by %c240_i32_11 dim 1 : vector<4x256xf32>, i32 -> vector<4x256xf32>
    %37 = arith.select %22, %36, %35 : vector<4x256xi1>, vector<4x256xf32>
    %38 = arith.select %24, %35, %36 : vector<4x256xi1>, vector<4x256xf32>
    %c16_i32_12 = arith.constant 16 : i32
    %39 = tpu.dynamic_rotate %30 by %c16_i32_12 dim 1 : vector<4x256xf32>, i32 -> vector<4x256xf32>
    %c240_i32_13 = arith.constant 240 : i32
    %40 = tpu.dynamic_rotate %30 by %c240_i32_13 dim 1 : vector<4x256xf32>, i32 -> vector<4x256xf32>
    %41 = arith.select %22, %40, %39 : vector<4x256xi1>, vector<4x256xf32>
    %42 = arith.select %24, %39, %40 : vector<4x256xi1>, vector<4x256xf32>
    %43 = tpu.concatenate %33, %37, %41, %29, %26, %30, %34, %38, %42 in 0 : vector<4x256xf32>, vector<4x256xf32>, vector<4x256xf32>, vector<4x256xf32>, vector<4x256xf32>, vector<4x256xf32>, vector<4x256xf32>, vector<4x256xf32>, vector<4x256xf32> -> vector<36x256xf32>
    %c0_14 = arith.constant 0 : index
    %c0_15 = arith.constant 0 : index
    %44 = vector.load %arg2[%c0_14, %c0_15] : memref<4x36xf32, #tpu.memory_space<vmem>>, vector<4x36xf32>
    %cst = arith.constant dense<0.000000e+00> : vector<4x256xf32>
    %45 = tpu.matmul %44, %43, %cst {dimension_numbers = #tpu.dot_dimension_numbers<[1], [0], [0], [1], [0, 0, 1, 1], [], []>} : vector<4x36xf32>, vector<36x256xf32>, vector<4x256xf32> -> vector<4x256xf32>
    %cst_16 = arith.constant dense<0.000000e+00> : vector<4xf32>
    %46 = vector.multi_reduction <add>, %45, %cst_16 [1] : vector<4x256xf32> to vector<4xf32>
    %47 = vector.shape_cast %46 : vector<4xf32> to vector<4x1xf32>
    %cst_17 = arith.constant 3.906250e-03 : f32
    %48 = vector.broadcast %cst_17 : f32 to vector<4x1xf32>
    %49 = arith.mulf %47, %48 : vector<4x1xf32>
    %50 = vector.broadcast %49 : vector<4x1xf32> to vector<4x256xf32>
    %51 = arith.subf %45, %50 : vector<4x256xf32>
    %52 = arith.mulf %51, %51 : vector<4x256xf32>
    %cst_18 = arith.constant dense<0.000000e+00> : vector<4xf32>
    %53 = vector.multi_reduction <add>, %52, %cst_18 [1] : vector<4x256xf32> to vector<4xf32>
    %54 = vector.shape_cast %53 : vector<4xf32> to vector<4x1xf32>
    %cst_19 = arith.constant 3.906250e-03 : f32
    %55 = vector.broadcast %cst_19 : f32 to vector<4x1xf32>
    %56 = arith.mulf %54, %55 : vector<4x1xf32>
    %cst_20 = arith.constant 9.99999974E-6 : f32
    %57 = vector.broadcast %cst_20 : f32 to vector<4x1xf32>
    %58 = arith.addf %56, %57 : vector<4x1xf32>
    %59 = math.rsqrt %58 : vector<4x1xf32>
    %60 = vector.broadcast %59 : vector<4x1xf32> to vector<4x256xf32>
    %61 = arith.mulf %51, %60 : vector<4x256xf32>
    %cst_21 = arith.constant 0.000000e+00 : f32
    %62 = vector.broadcast %cst_21 : f32 to vector<4x256xf32>
    %63 = arith.maximumf %61, %62 : vector<4x256xf32>
    %c1_i32_22 = arith.constant 1 : i32
    %64 = tpu.dynamic_rotate %63 by %c1_i32_22 dim 1 : vector<4x256xf32>, i32 -> vector<4x256xf32>
    %c255_i32_23 = arith.constant 255 : i32
    %65 = tpu.dynamic_rotate %63 by %c255_i32_23 dim 1 : vector<4x256xf32>, i32 -> vector<4x256xf32>
    %66 = arith.select %18, %65, %64 : vector<4x256xi1>, vector<4x256xf32>
    %67 = arith.select %20, %64, %65 : vector<4x256xi1>, vector<4x256xf32>
    %c16_i32_24 = arith.constant 16 : i32
    %68 = tpu.dynamic_rotate %66 by %c16_i32_24 dim 1 : vector<4x256xf32>, i32 -> vector<4x256xf32>
    %c240_i32_25 = arith.constant 240 : i32
    %69 = tpu.dynamic_rotate %66 by %c240_i32_25 dim 1 : vector<4x256xf32>, i32 -> vector<4x256xf32>
    %70 = arith.select %22, %69, %68 : vector<4x256xi1>, vector<4x256xf32>
    %71 = arith.select %24, %68, %69 : vector<4x256xi1>, vector<4x256xf32>
    %c16_i32_26 = arith.constant 16 : i32
    %72 = tpu.dynamic_rotate %63 by %c16_i32_26 dim 1 : vector<4x256xf32>, i32 -> vector<4x256xf32>
    %c240_i32_27 = arith.constant 240 : i32
    %73 = tpu.dynamic_rotate %63 by %c240_i32_27 dim 1 : vector<4x256xf32>, i32 -> vector<4x256xf32>
    %74 = arith.select %22, %73, %72 : vector<4x256xi1>, vector<4x256xf32>
    %75 = arith.select %24, %72, %73 : vector<4x256xi1>, vector<4x256xf32>
    %c16_i32_28 = arith.constant 16 : i32
    %76 = tpu.dynamic_rotate %67 by %c16_i32_28 dim 1 : vector<4x256xf32>, i32 -> vector<4x256xf32>
    %c240_i32_29 = arith.constant 240 : i32
    %77 = tpu.dynamic_rotate %67 by %c240_i32_29 dim 1 : vector<4x256xf32>, i32 -> vector<4x256xf32>
    %78 = arith.select %22, %77, %76 : vector<4x256xi1>, vector<4x256xf32>
    %79 = arith.select %24, %76, %77 : vector<4x256xi1>, vector<4x256xf32>
    %80 = tpu.concatenate %70, %74, %78, %66, %63, %67, %71, %75, %79 in 0 : vector<4x256xf32>, vector<4x256xf32>, vector<4x256xf32>, vector<4x256xf32>, vector<4x256xf32>, vector<4x256xf32>, vector<4x256xf32>, vector<4x256xf32>, vector<4x256xf32> -> vector<36x256xf32>
    %c0_30 = arith.constant 0 : index
    %c0_31 = arith.constant 0 : index
    %81 = vector.load %arg3[%c0_30, %c0_31] : memref<4x36xf32, #tpu.memory_space<vmem>>, vector<4x36xf32>
    %cst_32 = arith.constant dense<0.000000e+00> : vector<4x256xf32>
    %82 = tpu.matmul %81, %80, %cst_32 {dimension_numbers = #tpu.dot_dimension_numbers<[1], [0], [0], [1], [0, 0, 1, 1], [], []>} : vector<4x36xf32>, vector<36x256xf32>, vector<4x256xf32> -> vector<4x256xf32>
    %cst_33 = arith.constant dense<0.000000e+00> : vector<4xf32>
    %83 = vector.multi_reduction <add>, %82, %cst_33 [1] : vector<4x256xf32> to vector<4xf32>
    %84 = vector.shape_cast %83 : vector<4xf32> to vector<4x1xf32>
    %cst_34 = arith.constant 3.906250e-03 : f32
    %85 = vector.broadcast %cst_34 : f32 to vector<4x1xf32>
    %86 = arith.mulf %84, %85 : vector<4x1xf32>
    %87 = vector.broadcast %86 : vector<4x1xf32> to vector<4x256xf32>
    %88 = arith.subf %82, %87 : vector<4x256xf32>
    %89 = arith.mulf %88, %88 : vector<4x256xf32>
    %cst_35 = arith.constant dense<0.000000e+00> : vector<4xf32>
    %90 = vector.multi_reduction <add>, %89, %cst_35 [1] : vector<4x256xf32> to vector<4xf32>
    %91 = vector.shape_cast %90 : vector<4xf32> to vector<4x1xf32>
    %cst_36 = arith.constant 3.906250e-03 : f32
    %92 = vector.broadcast %cst_36 : f32 to vector<4x1xf32>
    %93 = arith.mulf %91, %92 : vector<4x1xf32>
    %cst_37 = arith.constant 9.99999974E-6 : f32
    %94 = vector.broadcast %cst_37 : f32 to vector<4x1xf32>
    %95 = arith.addf %93, %94 : vector<4x1xf32>
    %96 = math.rsqrt %95 : vector<4x1xf32>
    %97 = vector.broadcast %96 : vector<4x1xf32> to vector<4x256xf32>
    %98 = arith.mulf %88, %97 : vector<4x256xf32>
    %99 = arith.addf %26, %98 : vector<4x256xf32>
    %c0_38 = arith.constant 0 : index
    %c0_39 = arith.constant 0 : index
    %c0_40 = arith.constant 0 : index
    %100 = vector.load %arg4[%c0_38, %c0_39, %c0_40] : memref<1x4x256xf32, #tpu.memory_space<vmem>>, vector<1x4x256xf32>
    %101 = vector.shape_cast %100 : vector<1x4x256xf32> to vector<4x256xf32>
    %102 = vector.shape_cast %99 : vector<4x256xf32> to vector<1x4x256xf32>
    tpu.vector_store %arg4[%c0_38, %c0_39, %c0_40], %102 {strides = array<i32>} : memref<1x4x256xf32, #tpu.memory_space<vmem>>, vector<1x4x256xf32>,
    return
  }
  func.func @transform_0(%arg0: i32) -> (i32, i32, i32) {
    %c0_i32 = arith.constant 0 : i32
    %c0_i32_0 = arith.constant 0 : i32
    %c0_i32_1 = arith.constant 0 : i32
    return %arg0, %c0_i32, %c0_i32_0 : i32, i32, i32
  }
  func.func @transform_1(%arg0: i32) -> (i32, i32) {
    %c0_i32 = arith.constant 0 : i32
    %c0_i32_0 = arith.constant 0 : i32
    %c0_i32_1 = arith.constant 0 : i32
    return %c0_i32, %c0_i32_0 : i32, i32
  }
  func.func @transform_2(%arg0: i32) -> (i32, i32) {
    %c0_i32 = arith.constant 0 : i32
    %c0_i32_0 = arith.constant 0 : i32
    %c0_i32_1 = arith.constant 0 : i32
    return %c0_i32, %c0_i32_0 : i32, i32
  }
  func.func @transform_3(%arg0: i32) -> (i32, i32, i32) {
    %c0_i32 = arith.constant 0 : i32
    %c0_i32_0 = arith.constant 0 : i32
    %c0_i32_1 = arith.constant 0 : i32
    return %arg0, %c0_i32, %c0_i32_0 : i32, i32, i32
  }
}

</mosaic_0001>

<llo_original>
// kernel: tpu_custom_call.1
$region0: #{tpu_custom_call.1}
  #allocation0 [shape = 'u32[]', space=smem, size = 0x4, offset = 0x4, fixed_abs, tag = 'smem constant byte address 0x4 - core index']
  #allocation1 [shape = 'u32[144,128]{1,0:T(1,128)}', space=vmem, size = 0x12000, scoped, tag = 'internal scratch']
  %s0 = inlined_call_operand.hbm [shape: f32[2,4,256], index: 0, kind: input, shape index: {}]
  %s1 = inlined_call_operand.hbm [shape: f32[4,36], index: 1, kind: input, shape index: {}]
  %s2 = inlined_call_operand.vmem [shape: f32[4,36], index: 2, kind: input, shape index: {}]
  %s3 = inlined_call_operand.hbm [shape: f32[2,4,256], index: 3, kind: output, shape index: {}]
  %s4 = sld [smem:[#allocation0]]
  $region53: #{tpu_custom_call.1} parent=0
    _
  %s6 = ssub.s32 1, %s4
  %s7 = scalar_select 0, %s6, %s4
  $region1: #{tpu_custom_call.1} parent=0
    #allocation2 [shape = 'u8[8192]{0}', space=vmem, size = 0x2000, scoped, tag = 'input window, operand 0']
    #allocation3 [shape = 's32[2]{0}', space=sflag, size = 0x8, scoped, tag = 'scoped memory for tpu_custom_call.1']
    #allocation4 [shape = 's32[2]{0}', space=sflag, size = 0x8, scoped, tag = 'scoped memory for tpu_custom_call.1']
    #allocation5 [shape = 'u8[2048]{0}', space=vmem, size = 0x800, scoped, tag = 'input window, operand 1, single buffered']
    #allocation6 [shape = 's32[1]{0}', space=sflag, size = 0x4, scoped, tag = 'scoped memory for tpu_custom_call.1']
    #allocation7 [shape = 'u8[8192]{0}', space=vmem, size = 0x2000, scoped, tag = 'output window, operand 0']
    %8 = vsyncpa [#allocation3], 0
    %s9 = scalar_lea.sflag [#allocation3], 1
    %10 = vsyncpa %s9, 0
    %11 = vsyncpa [#allocation6], 0
    %12 = vsyncpa [#allocation4], 0
    %s13 = scalar_lea.sflag [#allocation4], 1
    %14 = vsyncpa %s13, 0
    loop: start=0, step=1, limit=4
    $region2: #{tpu_custom_call.1} parent=1 // loop_pre_header
      _
    $region3: #{tpu_custom_call.1} parent=1 // loop_header
      %s16 = sphi 0, %s20
      %p17 = scmp.ge.s32.totalorder %s16, 4
      %s26 = sphi 0, %s28
      %s29 = sphi 0, %s26
      %s30 = sphi 0, %s29
      %s46 = sphi 0, %s30
      %s50 = sphi 0, %s50
      %s52 = sphi 0, %s50
      %s53 = sphi 0, %s52
      %s67 = sphi 0, %s53
      %s71 = sphi 0, %s71
      %s73 = sphi 0, %s71
      %s74 = sphi 0, %s73
      %s88 = sphi 0, %s74
      %s94 = sphi 0, %s96
      %s97 = sphi 0, %s94
      %s98 = sphi 0, %s97
      %s114 = sphi 0, %s98
    $region4: #{tpu_custom_call.1} parent=1 // loop_header_branch
      %19 = sbr.rel (%p17) target = $region8
    $region5: #{tpu_custom_call.1} parent=1 // loop_body
      %s21 = ssub.s32 %s16, 1
      %s22 = ssub.s32 %s16, 2
      %s23 = sadd.s32 %s16, 1
      %s24 = ssub.s32 %s16, %s23
      %p25 = scmp.eq.s32.totalorder %s24, 0
      %s27 = sadd.s32 %s26, 1
      %s28 = scalar_select %p25, %s26, %s27
      %p31 = pneg %p25
      %p32 = scmp.eq.s32.totalorder %s16, 1
      %p33 = por %p31, %p32
      %p34 = scmp.ne.s32.totalorder %s26, %s29
      %p35 = scmp.eq.s32.totalorder %s16, 0
      %p36 = por %p34, %p35
      %p37 = scmp.ne.s32.totalorder %s26, %s29
      %p38 = scmp.eq.s32.totalorder %s21, 1
      %p39 = por %p37, %p38
      %p40 = scmp.ne.s32.totalorder %s29, %s30
      %p41 = scmp.eq.s32.totalorder %s21, 0
      %p42 = por %p40, %p41
      %p43 = scmp.ne.s32.totalorder %s29, %s30
      %p44 = scmp.eq.s32.totalorder %s22, 1
      %p45 = por %p43, %p44
      %p47 = scmp.ne.s32.totalorder %s30, %s46
      %p48 = scmp.eq.s32.totalorder %s22, 0
      %p49 = por %p47, %p48
      %s51 = sadd.s32 %s50, 1
      %p54 = scmp.eq.s32.totalorder %s16, 1
      %p55 = scmp.ne.s32.totalorder %s50, %s52
      %p56 = scmp.eq.s32.totalorder %s16, 0
      %p57 = por %p55, %p56
      %p58 = scmp.ne.s32.totalorder %s50, %s52
      %p59 = scmp.eq.s32.totalorder %s21, 1
      %p60 = por %p58, %p59
      %p61 = scmp.ne.s32.totalorder %s52, %s53
      %p62 = scmp.eq.s32.totalorder %s21, 0
      %p63 = por %p61, %p62
      %p64 = scmp.ne.s32.totalorder %s52, %s53
      %p65 = scmp.eq.s32.totalorder %s22, 1
      %p66 = por %p64, %p65
      %p68 = scmp.ne.s32.totalorder %s53, %s67
      %p69 = scmp.eq.s32.totalorder %s22, 0
      %p70 = por %p68, %p69
      %s72 = sadd.s32 %s71, 1
      %p75 = scmp.eq.s32.totalorder %s16, 1
      %p76 = scmp.ne.s32.totalorder %s71, %s73
      %p77 = scmp.eq.s32.totalorder %s16, 0
      %p78 = por %p76, %p77
      %p79 = scmp.ne.s32.totalorder %s71, %s73
      %p80 = scmp.eq.s32.totalorder %s21, 1
      %p81 = por %p79, %p80
      %p82 = scmp.ne.s32.totalorder %s73, %s74
      %p83 = scmp.eq.s32.totalorder %s21, 0
      %p84 = por %p82, %p83
      %p85 = scmp.ne.s32.totalorder %s73, %s74
      %p86 = scmp.eq.s32.totalorder %s22, 1
      %p87 = por %p85, %p86
      %p89 = scmp.ne.s32.totalorder %s74, %s88
      %p90 = scmp.eq.s32.totalorder %s22, 0
      %p91 = por %p89, %p90
      %s92 = ssub.s32 %s16, %s23
      %p93 = scmp.eq.s32.totalorder %s92, 0
      %s95 = sadd.s32 %s94, 1
      %s96 = scalar_select %p93, %s94, %s95
      %p99 = pneg %p93
      %p100 = scmp.eq.s32.totalorder %s16, 1
      %p101 = por %p99, %p100
      %p102 = scmp.ne.s32.totalorder %s94, %s97
      %p103 = scmp.eq.s32.totalorder %s16, 0
      %p104 = por %p102, %p103
      %p105 = scmp.ne.s32.totalorder %s94, %s97
      %p106 = scmp.eq.s32.totalorder %s21, 1
      %p107 = por %p105, %p106
      %p108 = scmp.ne.s32.totalorder %s97, %s98
      %p109 = scmp.eq.s32.totalorder %s21, 0
      %p110 = por %p108, %p109
      %p111 = scmp.ne.s32.totalorder %s97, %s98
      %p112 = scmp.eq.s32.totalorder %s22, 1
      %p113 = por %p111, %p112
      %p115 = scmp.ne.s32.totalorder %s98, %s114
      %p116 = scmp.eq.s32.totalorder %s22, 0
      %p117 = por %p115, %p116
      %p118 = scmp.le.s32.totalorder 1, %s16
      %p119 = scmp.lt.s32.totalorder %s16, 3
      %p120 = pnand %p118, %p119
      %p121 = pneg %p120
      // Predicated region
      $region9: #{tpu_custom_call.1} parent=5 // pred_check
        _
      $region10: #{tpu_custom_call.1} parent=5 // pred_check_branch
        %123 = sbr.rel (%p120) target = $region12
      $region11: #{tpu_custom_call.1} parent=5 // pred_region
        %s124 = ssub.s32 %s16, 1
        // Predicated region
        $region13: #{tpu_custom_call.1} parent=11 // pred_check
          %p125 = pneg %p63
        $region14: #{tpu_custom_call.1} parent=11 // pred_check_branch
          %127 = sbr.rel (%p125) target = $region16
        $region15: #{tpu_custom_call.1} parent=11 // pred_region
          %s129 = ssub.s32 64, 64
          %130 = vsyncadd [#allocation6], %s129
          %s132 = sshll.u32 [#allocation5], 4
          %s133 = int_to_ptr.vmem [resolvable:$true] %s132
          %135 = dma.hbm_to_vmem [thread:$0]  %s1, 64, %s133, [#allocation6]
        $region16: #{tpu_custom_call.1} parent=11 // pred_fallthru
          _
        // Predicated region
        $region17: #{tpu_custom_call.1} parent=11 // pred_check
          %p136 = pneg %p84
        $region18: #{tpu_custom_call.1} parent=11 // pred_check_branch
          %138 = sbr.rel (%p136) target = $region20
        $region19: #{tpu_custom_call.1} parent=11 // pred_region
          _
        $region20: #{tpu_custom_call.1} parent=11 // pred_fallthru
          _
      $region12: #{tpu_custom_call.1} parent=5 // pred_fallthru
        _
      %p139 = scmp.lt.s32.totalorder %s16, 2
      // Predicated region
      $region21: #{tpu_custom_call.1} parent=5 // pred_check
        %p140 = pneg %p139
      $region22: #{tpu_custom_call.1} parent=5 // pred_check_branch
        %142 = sbr.rel (%p140) target = $region24
      $region23: #{tpu_custom_call.1} parent=5 // pred_region
        // Predicated region
        $region25: #{tpu_custom_call.1} parent=23 // pred_check
          %p143 = pneg %p36
        $region26: #{tpu_custom_call.1} parent=23 // pred_check_branch
          %145 = sbr.rel (%p143) target = $region28
        $region27: #{tpu_custom_call.1} parent=23 // pred_region
          %s146 = sand.u32 %s26, 1
          %s147 = scalar_lea.sflag [#allocation3], %s146
          %s148 = sand.u32 %s26, 1
          %s149 = smul.addr %s148, 8
          %s150 = scalar_lea.vmem [#allocation2], %s149
          %s152 = ssub.s32 128, 128
          %153 = vsyncadd %s147, %s152
          %s154 = smul.addr %s16, 2
          %s155 = smul.addr %s154, 64
          %s156 = scalar_lea.hbm %s0, %s155
          %s158 = sshll.u32 %s150, 4
          %s159 = int_to_ptr.vmem [resolvable:$true] %s158
          %161 = dma.hbm_to_vmem [thread:$0]  %s156, 128, %s159, %s147
        $region28: #{tpu_custom_call.1} parent=23 // pred_fallthru
          _
      $region24: #{tpu_custom_call.1} parent=5 // pred_fallthru
        _
      %p162 = scmp.le.s32.totalorder 1, %s16
      %p163 = scmp.lt.s32.totalorder %s16, 3
      %p164 = pnand %p162, %p163
      %p165 = pneg %p164
      // Predicated region
      $region29: #{tpu_custom_call.1} parent=5 // pred_check
        _
      $region30: #{tpu_custom_call.1} parent=5 // pred_check_branch
        %167 = sbr.rel (%p164) target = $region32
      $region31: #{tpu_custom_call.1} parent=5 // pred_region
        %s168 = ssub.s32 %s16, 1
        %s169 = sand.u32 %s29, 1
        %s170 = scalar_lea.sflag [#allocation3], %s169
        %s171 = sand.u32 %s29, 1
        %s172 = smul.addr %s171, 8
        %s173 = scalar_lea.vmem [#allocation2], %s172
        // Predicated region
        $region33: #{tpu_custom_call.1} parent=31 // pred_check
          %p174 = pneg %p42
        $region34: #{tpu_custom_call.1} parent=31 // pred_check_branch
          %176 = sbr.rel (%p174) target = $region36
        $region35: #{tpu_custom_call.1} parent=31 // pred_region
          %177 = dma.done %s170, 128
        $region36: #{tpu_custom_call.1} parent=31 // pred_fallthru
          _
        // Predicated region
        $region37: #{tpu_custom_call.1} parent=31 // pred_check
          %p178 = pneg %p63
        $region38: #{tpu_custom_call.1} parent=31 // pred_check_branch
          %180 = sbr.rel (%p178) target = $region40
        $region39: #{tpu_custom_call.1} parent=31 // pred_region
          %181 = dma.done [#allocation6], 64
        $region40: #{tpu_custom_call.1} parent=31 // pred_fallthru
          _
        %s182 = sand.u32 %s29, 1
        %s183 = scalar_lea.sflag [#allocation3], %s182
        %s184 = sand.u32 %s29, 1
        %s185 = smul.addr %s184, 8
        %s186 = scalar_lea.vmem [#allocation2], %s185
        %p187 = pneg %p42
        %p188 = pneg %p39
        %p189 = pneg %p63
        %p190 = pneg %p60
        %p191 = pneg %p84
        %p192 = pneg %p81
        %p193 = pneg %p110
        %p194 = pneg %p107
        %s195 = sand.u32 %s97, 1
        %s196 = scalar_lea.sflag [#allocation4], %s195
        %s197 = sand.u32 %s97, 1
        %s198 = smul.addr %s197, 8
        %s199 = scalar_lea.vmem [#allocation7], %s198
        %v200 = vlaneseq
        %v201 = vand.u32 %v200, 127
        %v202 = vadd.s32 %v201, 128
        %vm203 = vcmp.lt.s32.totalorder %v201, 0
        %v204 = vsub.s32 0, %v201
        %v205 = vsel %vm203, %v204, %v201
        %v206 = vshrl.u32 %v205, 4
        %v207 = vand.u32 %v205, 15
        %v208 = vsub.s32 0, %v207
        %v209 = vsel %vm203, %v208, %v207
        %vm210 = vcmp.lt.s32.totalorder %v202, 0
        %v211 = vsub.s32 0, %v202
        %v212 = vsel %vm210, %v211, %v202
        %v213 = vshrl.u32 %v212, 4
        %v214 = vand.u32 %v212, 15
        %v215 = vsub.s32 0, %v214
        %v216 = vsel %vm210, %v215, %v214
        %vm217 = vcmp.ne.s32.totalorder %v209, 0
        %vm218 = vcmp.ne.s32.totalorder %v216, 0
        %vm219 = vcmp.lt.s32.totalorder %v209, 0
        %vm220 = vcmp.lt.s32.totalorder %v216, 0
        %vm221 = vmand %vm219, %vm217
        %vm222 = vmand %vm220, %vm218
        %v223 = vadd.s32 %v209, 16
        %v224 = vadd.s32 %v216, 16
        %v225 = vsel %vm221, %v223, %v209
        %v226 = vsel %vm222, %v224, %v216
        %vm227 = vcmp.eq.s32.totalorder %v225, 0
        %vm228 = vcmp.eq.s32.totalorder %v226, 0
        %vm229 = vcmp.eq.s32.totalorder %v225, 15
        %vm230 = vcmp.eq.s32.totalorder %v226, 15
        %vm231 = vcmp.lt.s32.totalorder %v201, 16
        %vm232 = vcmp.lt.s32.totalorder %v202, 16
        %vm233 = vcmp.ge.s32.totalorder %v201, 240
        %vm234 = vcmp.ge.s32.totalorder %v202, 240
        %v235 = vld [vmem:[%s173] sm:$0xff]
        %v237 = vcombine.high %v235, %v235
        %239 = vrot.lane.b32.xlu0 %v235, 1
        %v240 = vpop.permute.xlu0 %239
        %241 = vrot.lane.b32.xlu0 %v237, 1
        %v242 = vpop.permute.xlu0 %241
        %vm243 = vcmp.lt.s32.totalorder %v201, 1
        %v244 = vsel %vm243, %v240, %v242
        %v245 = vsel %vm243, %v242, %v240
        %246 = vrot.lane.b32.xlu0 %v235, 127
        %v247 = vpop.permute.xlu0 %246
        %248 = vrot.lane.b32.xlu0 %v237, 127
        %v249 = vpop.permute.xlu0 %248
        %vm250 = vcmp.lt.s32.totalorder %v201, 127
        %v251 = vsel %vm250, %v247, %v249
        %v252 = vsel %vm250, %v249, %v247
        %v253 = vsel %vm227, %v251, %v245
        %v254 = vsel %vm228, %v252, %v244
        %v255 = vsel %vm229, %v245, %v251
        %v256 = vsel %vm230, %v244, %v252
        %257 = vrot.lane.b32.xlu0 %v253, 16
        %v258 = vpop.permute.xlu0 %257
        %259 = vrot.lane.b32.xlu0 %v254, 16
        %v260 = vpop.permute.xlu0 %259
        %v261 = vsel %vm231, %v258, %v260
        %v262 = vsel %vm231, %v260, %v258
        %263 = vrot.lane.b32.xlu0 %v253, 112
        %v264 = vpop.permute.xlu0 %263
        %265 = vrot.lane.b32.xlu0 %v254, 112
        %v266 = vpop.permute.xlu0 %265
        %vm267 = vcmp.lt.s32.totalorder %v201, 112
        %v268 = vsel %vm267, %v264, %v266
        %v269 = vsel %vm267, %v266, %v264
        %v270 = vsel %vm231, %v268, %v262
        %v271 = vsel %vm232, %v269, %v261
        %v272 = vsel %vm233, %v262, %v268
        %v273 = vsel %vm234, %v261, %v269
        %274 = vrot.lane.b32.xlu0 %v235, 16
        %v275 = vpop.permute.xlu0 %274
        %276 = vrot.lane.b32.xlu0 %v237, 16
        %v277 = vpop.permute.xlu0 %276
        %v278 = vsel %vm231, %v275, %v277
        %v279 = vsel %vm231, %v277, %v275
        %280 = vrot.lane.b32.xlu0 %v235, 112
        %v281 = vpop.permute.xlu0 %280
        %282 = vrot.lane.b32.xlu0 %v237, 112
        %v283 = vpop.permute.xlu0 %282
        %v284 = vsel %vm267, %v281, %v283
        %v285 = vsel %vm267, %v283, %v281
        %v286 = vsel %vm231, %v284, %v279
        %v287 = vsel %vm232, %v285, %v278
        %v288 = vsel %vm233, %v279, %v284
        %v289 = vsel %vm234, %v278, %v285
        %290 = vrot.lane.b32.xlu0 %v255, 16
        %v291 = vpop.permute.xlu0 %290
        %292 = vrot.lane.b32.xlu0 %v256, 16
        %v293 = vpop.permute.xlu0 %292
        %v294 = vsel %vm231, %v291, %v293
        %v295 = vsel %vm231, %v293, %v291
        %296 = vrot.lane.b32.xlu0 %v255, 112
        %v297 = vpop.permute.xlu0 %296
        %298 = vrot.lane.b32.xlu0 %v256, 112
        %v299 = vpop.permute.xlu0 %298
        %v300 = vsel %vm267, %v297, %v299
        %v301 = vsel %vm267, %v299, %v297
        %v302 = vsel %vm231, %v300, %v295
        %v303 = vsel %vm232, %v301, %v294
        %v304 = vsel %vm233, %v295, %v300
        %v305 = vsel %vm234, %v294, %v301
        %v308 = vrot.slane %v286, 4
        %v309 = vrot.slane %v287, 4
        %v314 = vrot.slane %v253, 4
        %v315 = vrot.slane %v254, 4
        %v320 = vrot.slane %v255, 4
        %v321 = vrot.slane %v256, 4
        %v326 = vrot.slane %v288, 4
        %v327 = vrot.slane %v289, 4
        %vm330 = vcmask 1043456
        %v331 = vsel %vm330, %v270, %v308
        %v332 = vsel %vm330, %v271, %v309
        %v333 = vsel %vm330, %v302, %v314
        %v334 = vsel %vm330, %v303, %v315
        %v335 = vsel %vm330, %v235, %v320
        %v336 = vsel %vm330, %v237, %v321
        %v337 = vsel %vm330, %v272, %v326
        %v338 = vsel %vm330, %v273, %v327
        %v339 = vld [vmem:[#allocation5] sm:$0xf]
        %vm340 = vcmask 293888
        %v342 = vsel %vm340, %v339, 0
        %v345 = vsel %vm330, %v304, 0
        %v348 = vsel %vm330, %v305, 0
        %350 = vmatprep.subr.mxu0 %v332
        %351 = vmatpush1.msra.mxu0 %v331
        %352 = vmatprep.subr.mxu0 %v334
        %353 = vmatpush1.msra.mxu0 %v333
        %354 = vmatprep.subr.mxu0 %v336
        %355 = vmatpush1.msra.mxu0 %v335
        %356 = vmatprep.subr.mxu0 %v338
        %357 = vmatpush1.msra.mxu0 %v337
        %358 = vmatprep.subr.mxu0 %v348
        %359 = vmatpush1.msra.mxu0 %v345
        %360 = vmatprep.subr.mxu0 0.0
        %361 = vmatpush1.msra.mxu0 0.0
        %362 = vmatprep.subr.mxu0 0.0
        %363 = vmatpush1.msra.mxu0 0.0
        %364 = vmatprep.subr.mxu0 0.0
        %365 = vmatpush1.msra.mxu0 0.0
        %366 = vmatprep.subr.mxu0 0.0
        %367 = vmatpush1.msra.mxu0 0.0
        %368 = vmatprep.subr.mxu0 0.0
        %369 = vmatpush1.msra.mxu0 0.0
        %370 = vmatprep.subr.mxu0 0.0
        %371 = vmatpush1.msra.mxu0 0.0
        %372 = vmatprep.subr.mxu0 0.0
        %373 = vmatpush1.msra.mxu0 0.0
        %374 = vmatprep.subr.mxu0 0.0
        %375 = vmatpush1.msra.mxu0 0.0
        %376 = vmatprep.subr.mxu0 0.0
        %377 = vmatpush1.msra.mxu0 0.0
        %378 = vmatprep.subr.mxu0 0.0
        %379 = vmatpush1.msra.mxu0 0.0
        %380 = vmatprep.subr.mxu0 0.0
        %381 = vmatpush1.msra.mxu0 0.0
        %382 = vmatprep.subr.mxu0 0.0
        %383 = vmatpush1.msra.mxu0 0.0
        %384 = vmatprep.subr.mxu0 0.0
        %385 = vmatpush1.msra.mxu0 0.0
        %386 = vmatprep.subr.mxu0 0.0
        %387 = vmatpush1.msra.mxu0 0.0
        %388 = vmatprep.subr.mxu0 0.0
        %389 = vmatpush1.msra.mxu0 0.0
        %390 = vmatprep.subr.mxu0 0.0
        %391 = vmatpush1.msra.mxu0 0.0
        %392 = vmatprep.subr.mxu0 0.0
        %393 = vmatpush1.msra.mxu0 0.0
        %394 = vmatprep.subr.mxu0 0.0
        %395 = vmatpush1.msra.mxu0 0.0
        %396 = vmatprep.subr.mxu0 0.0
        %397 = vmatpush1.msra.mxu0 0.0
        %398 = vmatprep.subr.mxu0 0.0
        %399 = vmatpush1.msra.mxu0 0.0
        %400 = vmatprep.subr.mxu0 0.0
        %401 = vmatpush1.msra.mxu0 0.0
        %402 = vmatprep.subr.mxu0 0.0
        %403 = vmatpush1.msra.mxu0 0.0
        %404 = vmatprep.subr.mxu0 0.0
        %405 = vmatpush1.msra.mxu0 0.0
        %406 = vmatprep.subr.mxu0 0.0
        %407 = vmatpush1.msra.mxu0 0.0
        %408 = vmatprep.subr.mxu0 0.0
        %409 = vmatpush1.msra.mxu0 0.0
        %410 = vmatprep.subr.mxu0 0.0
        %411 = vmatpush1.msra.mxu0 0.0
        %412 = vmatprep.subr.mxu0 0.0
        %413 = vmatpush1.msra.mxu0 0.0
        %414 = vmatprep.mubr.f32.mxu0 0.0
        %415 = vmatmul.mubr.f32.gmra.mrb[0].mxu0 %v342
        %v416 = vpop.f32.mrb[0].mxu0
        %v417 = vadd.f32 0.0, %v416
        %v418 = vpop.f32.mrb[0].mxu0
        %v419 = vadd.f32 0.0, %v418
        %420 = vdwg.mxu0
        %v421 = vsel %vm330, %v417, 0.0
        %v422 = vsel %vm330, %v419, 0.0
        %v423 = vadd.f32 %v421, %v422
        %424 = vadd.xlane.f32.xlu0 %v423
        %v425 = vpop.xlane.xlu0 %424
        %v426 = vmul.f32 %v425, 0.00390625
        %v427 = vsub.f32 %v417, %v426
        %v428 = vsub.f32 %v419, %v426
        %v429 = vmul.f32 %v427, %v427
        %v430 = vmul.f32 %v428, %v428
        %v431 = vsel %vm330, %v429, 0.0
        %v432 = vsel %vm330, %v430, 0.0
        %v433 = vadd.f32 %v431, %v432
        %434 = vadd.xlane.f32.xlu0 %v433
        %v435 = vpop.xlane.xlu0 %434
        %v436 = vmul.f32 %v435, 0.00390625
        %v437 = vadd.f32 %v436, 1e-05
        %v438 = vrsqrt.pop %v437
        %v439 = vmul.f32 %v427, %v438
        %v440 = vmul.f32 %v428, %v438
        %v441 = vmax.f32 %v439, 0.0
        %v442 = vmax.f32 %v440, 0.0
        %443 = vrot.lane.b32.xlu0 %v441, 1
        %v444 = vpop.permute.xlu0 %443
        %445 = vrot.lane.b32.xlu0 %v442, 1
        %v446 = vpop.permute.xlu0 %445
        %v447 = vsel %vm243, %v444, %v446
        %v448 = vsel %vm243, %v446, %v444
        %449 = vrot.lane.b32.xlu0 %v441, 127
        %v450 = vpop.permute.xlu0 %449
        %451 = vrot.lane.b32.xlu0 %v442, 127
        %v452 = vpop.permute.xlu0 %451
        %v453 = vsel %vm250, %v450, %v452
        %v454 = vsel %vm250, %v452, %v450
        %v455 = vsel %vm227, %v453, %v448
        %v456 = vsel %vm228, %v454, %v447
        %v457 = vsel %vm229, %v448, %v453
        %v458 = vsel %vm230, %v447, %v454
        %459 = vrot.lane.b32.xlu0 %v455, 16
        %v460 = vpop.permute.xlu0 %459
        %461 = vrot.lane.b32.xlu0 %v456, 16
        %v462 = vpop.permute.xlu0 %461
        %v463 = vsel %vm231, %v460, %v462
        %v464 = vsel %vm231, %v462, %v460
        %465 = vrot.lane.b32.xlu0 %v455, 112
        %v466 = vpop.permute.xlu0 %465
        %467 = vrot.lane.b32.xlu0 %v456, 112
        %v468 = vpop.permute.xlu0 %467
        %v469 = vsel %vm267, %v466, %v468
        %v470 = vsel %vm267, %v468, %v466
        %v471 = vsel %vm231, %v469, %v464
        %v472 = vsel %vm232, %v470, %v463
        %v473 = vsel %vm233, %v464, %v469
        %v474 = vsel %vm234, %v463, %v470
        %475 = vrot.lane.b32.xlu0 %v441, 16
        %v476 = vpop.permute.xlu0 %475
        %477 = vrot.lane.b32.xlu0 %v442, 16
        %v478 = vpop.permute.xlu0 %477
        %v479 = vsel %vm231, %v476, %v478
        %v480 = vsel %vm231, %v478, %v476
        %481 = vrot.lane.b32.xlu0 %v441, 112
        %v482 = vpop.permute.xlu0 %481
        %483 = vrot.lane.b32.xlu0 %v442, 112
        %v484 = vpop.permute.xlu0 %483
        %v485 = vsel %vm267, %v482, %v484
        %v486 = vsel %vm267, %v484, %v482
        %v487 = vsel %vm231, %v485, %v480
        %v488 = vsel %vm232, %v486, %v479
        %v489 = vsel %vm233, %v480, %v485
        %v490 = vsel %vm234, %v479, %v486
        %491 = vrot.lane.b32.xlu0 %v457, 16
        %v492 = vpop.permute.xlu0 %491
        %493 = vrot.lane.b32.xlu0 %v458, 16
        %v494 = vpop.permute.xlu0 %493
        %v495 = vsel %vm231, %v492, %v494
        %v496 = vsel %vm231, %v494, %v492
        %497 = vrot.lane.b32.xlu0 %v457, 112
        %v498 = vpop.permute.xlu0 %497
        %499 = vrot.lane.b32.xlu0 %v458, 112
        %v500 = vpop.permute.xlu0 %499
        %v501 = vsel %vm267, %v498, %v500
        %v502 = vsel %vm267, %v500, %v498
        %v503 = vsel %vm231, %v501, %v496
        %v504 = vsel %vm232, %v502, %v495
        %v505 = vsel %vm233, %v496, %v501
        %v506 = vsel %vm234, %v495, %v502
        %v509 = vrot.slane %v487, 4
        %v510 = vrot.slane %v488, 4
        %v515 = vrot.slane %v455, 4
        %v516 = vrot.slane %v456, 4
        %v521 = vrot.slane %v457, 4
        %v522 = vrot.slane %v458, 4
        %v527 = vrot.slane %v489, 4
        %v528 = vrot.slane %v490, 4
        %v531 = vsel %vm330, %v471, %v509
        %v532 = vsel %vm330, %v472, %v510
        %v533 = vsel %vm330, %v503, %v515
        %v534 = vsel %vm330, %v504, %v516
        %v535 = vsel %vm330, %v441, %v521
        %v536 = vsel %vm330, %v442, %v522
        %v537 = vsel %vm330, %v473, %v527
        %v538 = vsel %vm330, %v474, %v528
        %v539 = vld [vmem:[%s2] sm:$0xf]
        %v541 = vsel %vm340, %v539, 0
        %v544 = vsel %vm330, %v505, 0
        %v547 = vsel %vm330, %v506, 0
        %549 = vmatprep.subr.mxu0 %v532
        %550 = vmatpush1.msra.mxu0 %v531
        %551 = vmatprep.subr.mxu0 %v534
        %552 = vmatpush1.msra.mxu0 %v533
        %553 = vmatprep.subr.mxu0 %v536
        %554 = vmatpush1.msra.mxu0 %v535
        %555 = vmatprep.subr.mxu0 %v538
        %556 = vmatpush1.msra.mxu0 %v537
        %557 = vmatprep.subr.mxu0 %v547
        %558 = vmatpush1.msra.mxu0 %v544
        %559 = vmatprep.subr.mxu0 0.0
        %560 = vmatpush1.msra.mxu0 0.0
        %561 = vmatprep.subr.mxu0 0.0
        %562 = vmatpush1.msra.mxu0 0.0
        %563 = vmatprep.subr.mxu0 0.0
        %564 = vmatpush1.msra.mxu0 0.0
        %565 = vmatprep.subr.mxu0 0.0
        %566 = vmatpush1.msra.mxu0 0.0
        %567 = vmatprep.subr.mxu0 0.0
        %568 = vmatpush1.msra.mxu0 0.0
        %569 = vmatprep.subr.mxu0 0.0
        %570 = vmatpush1.msra.mxu0 0.0
        %571 = vmatprep.subr.mxu0 0.0
        %572 = vmatpush1.msra.mxu0 0.0
        %573 = vmatprep.subr.mxu0 0.0
        %574 = vmatpush1.msra.mxu0 0.0
        %575 = vmatprep.subr.mxu0 0.0
        %576 = vmatpush1.msra.mxu0 0.0
        %577 = vmatprep.subr.mxu0 0.0
        %578 = vmatpush1.msra.mxu0 0.0
        %579 = vmatprep.subr.mxu0 0.0
        %580 = vmatpush1.msra.mxu0 0.0
        %581 = vmatprep.subr.mxu0 0.0
        %582 = vmatpush1.msra.mxu0 0.0
        %583 = vmatprep.subr.mxu0 0.0
        %584 = vmatpush1.msra.mxu0 0.0
        %585 = vmatprep.subr.mxu0 0.0
        %586 = vmatpush1.msra.mxu0 0.0
        %587 = vmatprep.subr.mxu0 0.0
        %588 = vmatpush1.msra.mxu0 0.0
        %589 = vmatprep.subr.mxu0 0.0
        %590 = vmatpush1.msra.mxu0 0.0
        %591 = vmatprep.subr.mxu0 0.0
        %592 = vmatpush1.msra.mxu0 0.0
        %593 = vmatprep.subr.mxu0 0.0
        %594 = vmatpush1.msra.mxu0 0.0
        %595 = vmatprep.subr.mxu0 0.0
        %596 = vmatpush1.msra.mxu0 0.0
        %597 = vmatprep.subr.mxu0 0.0
        %598 = vmatpush1.msra.mxu0 0.0
        %599 = vmatprep.subr.mxu0 0.0
        %600 = vmatpush1.msra.mxu0 0.0
        %601 = vmatprep.subr.mxu0 0.0
        %602 = vmatpush1.msra.mxu0 0.0
        %603 = vmatprep.subr.mxu0 0.0
        %604 = vmatpush1.msra.mxu0 0.0
        %605 = vmatprep.subr.mxu0 0.0
        %606 = vmatpush1.msra.mxu0 0.0
        %607 = vmatprep.subr.mxu0 0.0
        %608 = vmatpush1.msra.mxu0 0.0
        %609 = vmatprep.subr.mxu0 0.0
        %610 = vmatpush1.msra.mxu0 0.0
        %611 = vmatprep.subr.mxu0 0.0
        %612 = vmatpush1.msra.mxu0 0.0
        %613 = vmatprep.mubr.f32.mxu0 0.0
        %614 = vmatmul.mubr.f32.gmra.mrb[0].mxu0 %v541
        %v615 = vpop.f32.mrb[0].mxu0
        %v616 = vadd.f32 0.0, %v615
        %v617 = vpop.f32.mrb[0].mxu0
        %v618 = vadd.f32 0.0, %v617
        %619 = vdwg.mxu0
        %v620 = vsel %vm330, %v616, 0.0
        %v621 = vsel %vm330, %v618, 0.0
        %v622 = vadd.f32 %v620, %v621
        %623 = vadd.xlane.f32.xlu0 %v622
        %v624 = vpop.xlane.xlu0 %623
        %v625 = vmul.f32 %v624, 0.00390625
        %v626 = vsub.f32 %v616, %v625
        %v627 = vsub.f32 %v618, %v625
        %v628 = vmul.f32 %v626, %v626
        %v629 = vmul.f32 %v627, %v627
        %v630 = vsel %vm330, %v628, 0.0
        %v631 = vsel %vm330, %v629, 0.0
        %v632 = vadd.f32 %v630, %v631
        %633 = vadd.xlane.f32.xlu0 %v632
        %v634 = vpop.xlane.xlu0 %633
        %v635 = vmul.f32 %v634, 0.00390625
        %v636 = vadd.f32 %v635, 1e-05
        %v637 = vrsqrt.pop %v636
        %v638 = vmul.f32 %v626, %v637
        %v639 = vmul.f32 %v627, %v637
        %v642 = vcombine.low %v638, %v639
        %v644 = vadd.f32 %v235, %v642
        %645 = vst [vmem:[%s199] sm:$0xff] %v644
        %s646 = sand.u32 %s97, 1
        %s647 = scalar_lea.sflag [#allocation4], %s646
        %s648 = sand.u32 %s97, 1
        %s649 = smul.addr %s648, 8
        %s650 = scalar_lea.vmem [#allocation7], %s649
        // Predicated region
        $region41: #{tpu_custom_call.1} parent=31 // pred_check
          %p651 = pneg %p107
        $region42: #{tpu_custom_call.1} parent=31 // pred_check_branch
          %653 = sbr.rel (%p651) target = $region44
        $region43: #{tpu_custom_call.1} parent=31 // pred_region
          %s655 = ssub.s32 128, 128
          %656 = vsyncadd %s647, %s655
          %s657 = smul.addr %s21, 2
          %s658 = smul.addr %s657, 64
          %s659 = scalar_lea.hbm %s3, %s658
          %s661 = sshll.u32 %s650, 4
          %s662 = int_to_ptr.vmem [resolvable:$true] %s661
          %664 = dma.vmem_to_hbm [thread:$0]  %s662, 128, %s659, %s647
        $region44: #{tpu_custom_call.1} parent=31 // pred_fallthru
          _
      $region32: #{tpu_custom_call.1} parent=5 // pred_fallthru
        _
      %p665 = scmp.le.s32.totalorder 2, %s16
      // Predicated region
      $region45: #{tpu_custom_call.1} parent=5 // pred_check
        %p666 = pneg %p665
      $region46: #{tpu_custom_call.1} parent=5 // pred_check_branch
        %668 = sbr.rel (%p666) target = $region48
      $region47: #{tpu_custom_call.1} parent=5 // pred_region
        %s669 = ssub.s32 %s16, 2
        // Predicated region
        $region49: #{tpu_custom_call.1} parent=47 // pred_check
          %p670 = pneg %p113
        $region50: #{tpu_custom_call.1} parent=47 // pred_check_branch
          %672 = sbr.rel (%p670) target = $region52
        $region51: #{tpu_custom_call.1} parent=47 // pred_region
          %s673 = sand.u32 %s98, 1
          %s674 = scalar_lea.sflag [#allocation4], %s673
          %s675 = sand.u32 %s98, 1
          %s676 = smul.addr %s675, 8
          %s677 = scalar_lea.vmem [#allocation7], %s676
          %678 = dma.done %s674, 128
        $region52: #{tpu_custom_call.1} parent=47 // pred_fallthru
          _
      $region48: #{tpu_custom_call.1} parent=5 // pred_fallthru
        _
    $region6: #{tpu_custom_call.1} parent=1 // loop_footer
      %s20 = sadd.s32 1, %s16
    $region7: #{tpu_custom_call.1} parent=1 // loop_footer_branch
      %15 = sbr.rel target = $region3
    $region8: #{tpu_custom_call.1} parent=1 // loop_exit
      _
    %679 = vsyncpa [#allocation3], 1
    %s680 = scalar_lea.sflag [#allocation3], 1
    %681 = vsyncpa %s680, 1
    %682 = vsyncpa [#allocation6], 1
    %683 = vsyncpa [#allocation4], 1
    %s684 = scalar_lea.sflag [#allocation4], 1
    %685 = vsyncpa %s684, 1

</llo_original>
